<compile_context>
chip_gen: v7x
topology: tpu7x:2x2x1
jax: 0.10.0
libtpu: 0.0.40
codegen_flags: <defaults>
</compile_context>

<pallas_src>
import jax
import jax.numpy as jnp
from jax.experimental import pallas as pl
from jax.experimental.pallas import tpu as pltpu


# ---------------------------------------------------------------------------
# Kernel 1: fused 1x1-conv projections (single pass over x)
#   q = Wq @ x + bq   (Cq, tile)
#   k = Wk @ x + bk   (Cq, tile)
#   v = Wv @ x + bv   (C,  tile)
# ---------------------------------------------------------------------------
def _qkv_projection_kernel(x_ref, wq_ref, bq_ref, wk_ref, bk_ref,
                           wv_ref, bv_ref, q_ref, k_ref, v_ref):
    wq = wq_ref[...]
    wk = wk_ref[...]
    wv = wv_ref[...]
    xm = x_ref[0].astype(wq.dtype)                      # (C, tp) MXU operand dtype

    q = jnp.dot(wq, xm, preferred_element_type=jnp.float32) + bq_ref[...]
    k = jnp.dot(wk, xm, preferred_element_type=jnp.float32) + bk_ref[...]
    v = jnp.dot(wv, xm, preferred_element_type=jnp.float32) + bv_ref[...]

    q_ref[0] = q.astype(q_ref.dtype)                    # lane-dense stores
    k_ref[0] = k.astype(k_ref.dtype)
    v_ref[0] = v.astype(v_ref.dtype)


# ---------------------------------------------------------------------------
# Kernel 2: flash-style attention over pre-projected q/k/v + residual
#   grid = (B, n_q, n_k); the full (N, N) score matrix is never materialized.
# ---------------------------------------------------------------------------
def _flash_attention_kernel(q_ref, k_ref, v_ref, xres_ref, gamma_ref, o_ref,
                            m_scr, l_scr, acc_scr):
    ki = pl.program_id(2)
    nk = pl.num_programs(2)

    @pl.when(ki == 0)
    def _init():
        m_scr[...] = jnp.full_like(m_scr, -jnp.inf)
        l_scr[...] = jnp.zeros_like(l_scr)
        acc_scr[...] = jnp.zeros_like(acc_scr)

    q = q_ref[0]                      # (Cq, tq)  mxu dtype
    k = k_ref[0]                      # (Cq, tk)
    v = v_ref[0]                      # (C,  tk)

    # scores s[j, i] = sum_c k[c, j] * q[c, i]  -> (tk, tq).
    # Contract dim 0 of both operands (no explicit k.T materialization).
    s = jax.lax.dot_general(
        k, q, dimension_numbers=(((0,), (0,)), ((), ())),
        preferred_element_type=jnp.float32)                             # (tk, tq)

    # online softmax over the key axis (axis 0); state stays f32.
    m_prev = m_scr[...]                                                 # (1, tq)
    m_new = jnp.maximum(m_prev, jnp.max(s, axis=0, keepdims=True))      # (1, tq)
    alpha = jnp.exp(m_prev - m_new)                                     # (1, tq)
    # block exp in the MXU operand dtype (bf16 on v6e/v7x halves EUP work,
    # and p feeds the v@p matmul with no extra cast).
    p = jnp.exp((s - m_new).astype(v.dtype))                            # (tk, tq)
    l_scr[...] = alpha * l_scr[...] + jnp.sum(
        p.astype(jnp.float32), axis=0, keepdims=True)
    acc_scr[...] = alpha * acc_scr[...] + jnp.dot(
        v, p, preferred_element_type=jnp.float32)                       # (C, tq)
    m_scr[...] = m_new

    @pl.when(ki == nk - 1)
    def _finalize():
        inv_l = pl.reciprocal(l_scr[...], approx=True)                  # EUP slot
        out = acc_scr[...] * inv_l                                      # (C, tq)
        # residual read only here (not on every key iteration), full precision.
        x_res = xres_ref[0].astype(jnp.float32)
        y = gamma_ref[0, 0] * out + x_res
        o_ref[0] = y.astype(o_ref.dtype)                                # lane-dense store


def _pick_tile(n, cap=512):
    """Largest tile dividing n: prefer multiples of 256 (v6e/v7x MXU width),
    fall back to multiples of 128, else n itself (full-dim block is legal)."""
    if n <= cap:
        return n
    for base in (256, 128):
        t = (cap // base) * base
        while t >= base:
            if n % t == 0:
                return t
            t -= base
    return n


def self_attention_pallas(x_nchw, wq, bq, wk, bk, wv, bv, gamma, *,
                          tq=None, tk=None, tp=None,
                          mxu_dtype=jnp.bfloat16,
                          vmem_limit_bytes=None):
    """SAGAN self-attention forward.

    x_nchw: (B, C, H, W).  wq/wk: (C//8, C), wv: (C, C) (PyTorch Conv2d
    weight[:, :, 0, 0] layout).  bq/bk: (C//8,), bv: (C,).  gamma: (1,).

    tq/tk/tp: query-tile / key-block / projection-tile sizes along N = H*W
    (multiples of 128, or N).  Default cap 512 fits the default scoped-VMEM
    budget on v5e/v6e/v7x at C <= 512; on v5e with large C in f32 cap at 256
    or raise vmem_limit_bytes; on v7x with small C the cap can be raised
    (64 MiB physical VMEM, 32 MiB scoped default).
    mxu_dtype: bf16 by default (v6e/v7x native, halves input DMA); use
    jnp.float32 for tight-accuracy checks.  Softmax state, accumulation and
    the residual add are always f32.
    """
    B, C, H, W = x_nchw.shape
    N = H * W
    Cq = wq.shape[0]
    out_dtype = x_nchw.dtype

    if tq is None:
        tq = _pick_tile(N)
        # v7x has 2 TensorCores; make sure the parallel axes (B, n_q) give
        # both cores work even at B == 1.
        if B * (N // tq) < 2 and (N // 2) % 128 == 0:
            tq = N // 2
    if tk is None:
        tk = _pick_tile(N)
    if tp is None:
        tp = _pick_tile(N)
    assert N % tq == 0 and N % tk == 0 and N % tp == 0, "tiles must divide H*W"
    assert (tq % 128 == 0 or tq == N) and (tk % 128 == 0 or tk == N)
    assert (tp % 128 == 0 or tp == N)

    # NCHW -> (B, C, N): pure reshape, N lands on the lane axis.  Kept in the
    # ORIGINAL dtype: used for the (single-pass) projection and the residual.
    x_cn = x_nchw.reshape(B, C, N)

    wq_c = wq.astype(mxu_dtype)
    wk_c = wk.astype(mxu_dtype)
    wv_c = wv.astype(mxu_dtype)
    bq_c = bq.reshape(Cq, 1).astype(jnp.float32)
    bk_c = bk.reshape(Cq, 1).astype(jnp.float32)
    bv_c = bv.reshape(C, 1).astype(jnp.float32)
    gamma_c = gamma.reshape(1, 1).astype(jnp.float32)

    isz_x = jnp.dtype(out_dtype).itemsize
    isz_m = jnp.dtype(mxu_dtype).itemsize
    n_q = N // tq
    n_k = N // tk
    n_p = N // tp

    # ---------------- projection pass (single sweep over x) ----------------
    proj_cost = pl.CostEstimate(
        flops=int(2 * B * N * C * (2 * Cq + C)),
        transcendentals=0,
        bytes_accessed=int(isz_x * B * C * N                     # x in
                           + isz_m * C * (2 * Cq + C)            # weights
                           + 4 * (2 * Cq + C)                    # biases (f32)
                           + isz_m * B * N * (2 * Cq + C)))      # q, k, v out

    q_cn, k_cn, v_cn = pl.pallas_call(
        _qkv_projection_kernel,
        out_shape=(jax.ShapeDtypeStruct((B, Cq, N), mxu_dtype),
                   jax.ShapeDtypeStruct((B, Cq, N), mxu_dtype),
                   jax.ShapeDtypeStruct((B, C, N), mxu_dtype)),
        grid_spec=pltpu.PrefetchScalarGridSpec(
            num_scalar_prefetch=0,
            grid=(B, n_p),
            in_specs=[
                pl.BlockSpec((1, C, tp), lambda b, ti: (b, 0, ti)),   # x tile
                pl.BlockSpec((Cq, C), lambda b, ti: (0, 0)),          # Wq
                pl.BlockSpec((Cq, 1), lambda b, ti: (0, 0)),          # bq
                pl.BlockSpec((Cq, C), lambda b, ti: (0, 0)),          # Wk
                pl.BlockSpec((Cq, 1), lambda b, ti: (0, 0)),          # bk
                pl.BlockSpec((C, C), lambda b, ti: (0, 0)),           # Wv
                pl.BlockSpec((C, 1), lambda b, ti: (0, 0)),           # bv
            ],
            out_specs=[
                pl.BlockSpec((1, Cq, tp), lambda b, ti: (b, 0, ti)),
                pl.BlockSpec((1, Cq, tp), lambda b, ti: (b, 0, ti)),
                pl.BlockSpec((1, C, tp), lambda b, ti: (b, 0, ti)),
            ]),
        compiler_params=pltpu.CompilerParams(
            dimension_semantics=("parallel", "parallel"),
            vmem_limit_bytes=vmem_limit_bytes),
        cost_estimate=proj_cost,
    )(x_cn, wq_c, bq_c, wk_c, bk_c, wv_c, bv_c)

    # ---------------- flash attention + residual ----------------
    attn_cost = pl.CostEstimate(
        flops=int(2 * B * N * N * (Cq + C)),
        transcendentals=int(B * N * N),
        bytes_accessed=int(isz_m * B * N * Cq                    # q, one pass
                           + isz_m * B * N * (Cq + C) * n_q      # k,v refetched per q-tile
                           + isz_x * B * C * N                   # residual x
                           + isz_x * B * C * N))                 # output

    out_cn = pl.pallas_call(
        _flash_attention_kernel,
        out_shape=jax.ShapeDtypeStruct((B, C, N), out_dtype),
        grid_spec=pltpu.PrefetchScalarGridSpec(
            num_scalar_prefetch=0,
            grid=(B, n_q, n_k),
            in_specs=[
                pl.BlockSpec((1, Cq, tq), lambda b, qi, ki: (b, 0, qi)),   # q tile
                pl.BlockSpec((1, Cq, tk), lambda b, qi, ki: (b, 0, ki)),   # k block
                pl.BlockSpec((1, C, tk), lambda b, qi, ki: (b, 0, ki)),    # v block
                pl.BlockSpec((1, C, tq), lambda b, qi, ki: (b, 0, qi)),    # residual x
                pl.BlockSpec(memory_space=pltpu.MemorySpace.SMEM),         # gamma (1,1)
            ],
            out_specs=pl.BlockSpec((1, C, tq), lambda b, qi, ki: (b, 0, qi)),
            scratch_shapes=[
                pltpu.VMEM((1, tq), jnp.float32),    # running max
                pltpu.VMEM((1, tq), jnp.float32),    # running sum
                pltpu.VMEM((C, tq), jnp.float32),    # output accumulator
            ]),
        compiler_params=pltpu.CompilerParams(
            dimension_semantics=("parallel", "parallel", "arbitrary"),
            vmem_limit_bytes=vmem_limit_bytes),
        cost_estimate=attn_cost,
    )(q_cn, k_cn, v_cn, x_cn, gamma_c)

    # (B, C, N) -> NCHW: pure reshape, no transpose.
    return out_cn.reshape(B, C, H, W)


def self_attention_ref(x_nchw, wq, bq, wk, bk, wv, bv, gamma):
    """Pure-JAX reference mirroring the PyTorch forward (NCHW)."""
    B, C, H, W = x_nchw.shape
    N = H * W
    x_flat = x_nchw.reshape(B, C, N)                                    # (B, C, N)
    q = jnp.einsum('oc,bcn->bon', wq, x_flat) + bq[None, :, None]       # (B, Cq, N)
    k = jnp.einsum('oc,bcn->bon', wk, x_flat) + bk[None, :, None]       # (B, Cq, N)
    v = jnp.einsum('oc,bcn->bon', wv, x_flat) + bv[None, :, None]       # (B, C, N)
    attn = jax.nn.softmax(jnp.einsum('bcn,bcm->bnm', q, k), axis=-1)    # (B, N, N)
    out = jnp.einsum('bcm,bnm->bcn', v, attn).reshape(B, C, H, W)
    return gamma.reshape(()) * out + x_nchw


if __name__ == "__main__":
    key = jax.random.PRNGKey(0)
    B, C, H, W = 2, 16, 16, 16        # N = 256
    Cq = C // 8

    k0, k1, k2, k3, k4, k5, k6 = jax.random.split(key, 7)
    x = jax.random.normal(k0, (B, C, H, W), dtype=jnp.float32)

    # Conv2d-1x1 weights in PyTorch (out, in) layout; biases (out,).
    wq = 0.1 * jax.random.normal(k1, (Cq, C), dtype=jnp.float32)
    bq = 0.1 * jax.random.normal(k2, (Cq,), dtype=jnp.float32)
    wk = 0.1 * jax.random.normal(k3, (Cq, C), dtype=jnp.float32)
    bk = 0.1 * jax.random.normal(k4, (Cq,), dtype=jnp.float32)
    wv = 0.1 * jax.random.normal(k5, (C, C), dtype=jnp.float32)
    bv = 0.1 * jax.random.normal(k6, (C,), dtype=jnp.float32)
    # PyTorch inits gamma = 0 (output == x); use a nonzero value so the
    # attention path is actually exercised.  Semantics (gamma*out + x) unchanged.
    gamma = jnp.full((1,), 0.5, dtype=jnp.float32)

    y_ref = self_attention_ref(x, wq, bq, wk, bk, wv, bv, gamma)

    # f32 MXU path: tight correctness check.
    y32 = self_attention_pallas(x, wq, bq, wk, bk, wv, bv, gamma,
                                mxu_dtype=jnp.float32)
    y32 = jax.block_until_ready(y32)
    assert y32.shape == (B, C, H, W)
    err32 = jnp.max(jnp.abs(y32 - y_ref))
    assert jnp.allclose(y32, y_ref, atol=2e-3, rtol=2e-3), f"f32 max abs err {err32}"

    # bf16 MXU path (throughput default on v6e/v7x): looser check.
    ybf = self_attention_pallas(x, wq, bq, wk, bk, wv, bv, gamma)
    ybf = jax.block_until_ready(ybf)
    errbf = jnp.max(jnp.abs(ybf - y_ref))
    assert jnp.allclose(ybf, y_ref, atol=1e-1, rtol=1e-1), f"bf16 max abs err {errbf}"

    print("KERNEL_OK")
</pallas_src>

<mosaic_0001>
module attributes {stable_mosaic.version = 11 : i64} {
  func.func @_qkv_projection_kernel(%arg0: i32, %arg1: i32, %arg2: memref<1x16x256xf32, #tpu.memory_space<vmem>>, %arg3: memref<2x16xf32, #tpu.memory_space<vmem>>, %arg4: memref<2x1xf32, #tpu.memory_space<vmem>>, %arg5: memref<2x16xf32, #tpu.memory_space<vmem>>, %arg6: memref<2x1xf32, #tpu.memory_space<vmem>>, %arg7: memref<16x16xf32, #tpu.memory_space<vmem>>, %arg8: memref<16x1xf32, #tpu.memory_space<vmem>>, %arg9: memref<1x2x256xf32, #tpu.memory_space<vmem>>, %arg10: memref<1x2x256xf32, #tpu.memory_space<vmem>>, %arg11: memref<1x16x256xf32, #tpu.memory_space<vmem>>) attributes {dimension_semantics = [#tpu.dimension_semantics<parallel>, #tpu.dimension_semantics<parallel>], iteration_bounds = array<i64: 2, 1>, scalar_prefetch = 0 : i64, scratch_operands = 0 : i64, tpu.core_type = #tpu.core_type<tc>, window_params = [{transform_indices = @transform_0, window_bounds = array<i64: 1, 16, 256>}, {pipeline_mode = #tpu.pipeline_mode<synchronous>, transform_indices = @transform_1, window_bounds = array<i64: 2, 16>}, {pipeline_mode = #tpu.pipeline_mode<synchronous>, transform_indices = @transform_2, window_bounds = array<i64: 2, 1>}, {pipeline_mode = #tpu.pipeline_mode<synchronous>, transform_indices = @transform_3, window_bounds = array<i64: 2, 16>}, {pipeline_mode = #tpu.pipeline_mode<synchronous>, transform_indices = @transform_4, window_bounds = array<i64: 2, 1>}, {pipeline_mode = #tpu.pipeline_mode<synchronous>, transform_indices = @transform_5, window_bounds = array<i64: 16, 16>}, {pipeline_mode = #tpu.pipeline_mode<synchronous>, transform_indices = @transform_6, window_bounds = array<i64: 16, 1>}, {transform_indices = @transform_7, window_bounds = array<i64: 1, 2, 256>}, {transform_indices = @transform_8, window_bounds = array<i64: 1, 2, 256>}, {transform_indices = @transform_9, window_bounds = array<i64: 1, 16, 256>}]} {
    %c0 = arith.constant 0 : index
    %c0_0 = arith.constant 0 : index
    %0 = vector.load %arg3[%c0, %c0_0] : memref<2x16xf32, #tpu.memory_space<vmem>>, vector<2x16xf32>
    %c0_1 = arith.constant 0 : index
    %c0_2 = arith.constant 0 : index
    %1 = vector.load %arg5[%c0_1, %c0_2] : memref<2x16xf32, #tpu.memory_space<vmem>>, vector<2x16xf32>
    %c0_3 = arith.constant 0 : index
    %c0_4 = arith.constant 0 : index
    %2 = vector.load %arg7[%c0_3, %c0_4] : memref<16x16xf32, #tpu.memory_space<vmem>>, vector<16x16xf32>
    %c0_5 = arith.constant 0 : index
    %c0_6 = arith.constant 0 : index
    %c0_7 = arith.constant 0 : index
    %3 = vector.load %arg2[%c0_5, %c0_6, %c0_7] : memref<1x16x256xf32, #tpu.memory_space<vmem>>, vector<1x16x256xf32>
    %4 = vector.shape_cast %3 : vector<1x16x256xf32> to vector<16x256xf32>
    %cst = arith.constant dense<0.000000e+00> : vector<2x256xf32>
    %5 = tpu.matmul %0, %4, %cst {dimension_numbers = #tpu.dot_dimension_numbers<[1], [0], [0], [1], [0, 0, 1, 1], [], []>} : vector<2x16xf32>, vector<16x256xf32>, vector<2x256xf32> -> vector<2x256xf32>
    %c0_8 = arith.constant 0 : index
    %c0_9 = arith.constant 0 : index
    %6 = vector.load %arg4[%c0_8, %c0_9] : memref<2x1xf32, #tpu.memory_space<vmem>>, vector<2x1xf32>
    %7 = vector.broadcast %6 : vector<2x1xf32> to vector<2x256xf32>
    %8 = arith.addf %5, %7 : vector<2x256xf32>
    %cst_10 = arith.constant dense<0.000000e+00> : vector<2x256xf32>
    %9 = tpu.matmul %1, %4, %cst_10 {dimension_numbers = #tpu.dot_dimension_numbers<[1], [0], [0], [1], [0, 0, 1, 1], [], []>} : vector<2x16xf32>, vector<16x256xf32>, vector<2x256xf32> -> vector<2x256xf32>
    %c0_11 = arith.constant 0 : index
    %c0_12 = arith.constant 0 : index
    %10 = vector.load %arg6[%c0_11, %c0_12] : memref<2x1xf32, #tpu.memory_space<vmem>>, vector<2x1xf32>
    %11 = vector.broadcast %10 : vector<2x1xf32> to vector<2x256xf32>
    %12 = arith.addf %9, %11 : vector<2x256xf32>
    %cst_13 = arith.constant dense<0.000000e+00> : vector<16x256xf32>
    %13 = tpu.matmul %2, %4, %cst_13 {dimension_numbers = #tpu.dot_dimension_numbers<[1], [0], [0], [1], [0, 0, 1, 1], [], []>} : vector<16x16xf32>, vector<16x256xf32>, vector<16x256xf32> -> vector<16x256xf32>
    %c0_14 = arith.constant 0 : index
    %c0_15 = arith.constant 0 : index
    %14 = vector.load %arg8[%c0_14, %c0_15] : memref<16x1xf32, #tpu.memory_space<vmem>>, vector<16x1xf32>
    %15 = vector.broadcast %14 : vector<16x1xf32> to vector<16x256xf32>
    %16 = arith.addf %13, %15 : vector<16x256xf32>
    %c0_16 = arith.constant 0 : index
    %c0_17 = arith.constant 0 : index
    %c0_18 = arith.constant 0 : index
    %17 = vector.load %arg9[%c0_16, %c0_17, %c0_18] : memref<1x2x256xf32, #tpu.memory_space<vmem>>, vector<1x2x256xf32>
    %18 = vector.shape_cast %17 : vector<1x2x256xf32> to vector<2x256xf32>
    %19 = vector.shape_cast %8 : vector<2x256xf32> to vector<1x2x256xf32>
    tpu.vector_store %arg9[%c0_16, %c0_17, %c0_18], %19 {strides = array<i32>} : memref<1x2x256xf32, #tpu.memory_space<vmem>>, vector<1x2x256xf32>,
    %c0_19 = arith.constant 0 : index
    %c0_20 = arith.constant 0 : index
    %c0_21 = arith.constant 0 : index
    %20 = vector.load %arg10[%c0_19, %c0_20, %c0_21] : memref<1x2x256xf32, #tpu.memory_space<vmem>>, vector<1x2x256xf32>
    %21 = vector.shape_cast %20 : vector<1x2x256xf32> to vector<2x256xf32>
    %22 = vector.shape_cast %12 : vector<2x256xf32> to vector<1x2x256xf32>
    tpu.vector_store %arg10[%c0_19, %c0_20, %c0_21], %22 {strides = array<i32>} : memref<1x2x256xf32, #tpu.memory_space<vmem>>, vector<1x2x256xf32>,
    %c0_22 = arith.constant 0 : index
    %c0_23 = arith.constant 0 : index
    %c0_24 = arith.constant 0 : index
    %23 = vector.load %arg11[%c0_22, %c0_23, %c0_24] : memref<1x16x256xf32, #tpu.memory_space<vmem>>, vector<1x16x256xf32>
    %24 = vector.shape_cast %23 : vector<1x16x256xf32> to vector<16x256xf32>
    %25 = vector.shape_cast %16 : vector<16x256xf32> to vector<1x16x256xf32>
    tpu.vector_store %arg11[%c0_22, %c0_23, %c0_24], %25 {strides = array<i32>} : memref<1x16x256xf32, #tpu.memory_space<vmem>>, vector<1x16x256xf32>,
    return
  }
  func.func @transform_0(%arg0: i32, %arg1: i32) -> (i32, i32, i32) {
    %c0_i32 = arith.constant 0 : i32
    %c0_i32_0 = arith.constant 0 : i32
    return %arg0, %c0_i32, %arg1 : i32, i32, i32
  }
  func.func @transform_1(%arg0: i32, %arg1: i32) -> (i32, i32) {
    %c0_i32 = arith.constant 0 : i32
    %c0_i32_0 = arith.constant 0 : i32
    %c0_i32_1 = arith.constant 0 : i32
    return %c0_i32, %c0_i32_0 : i32, i32
  }
  func.func @transform_2(%arg0: i32, %arg1: i32) -> (i32, i32) {
    %c0_i32 = arith.constant 0 : i32
    %c0_i32_0 = arith.constant 0 : i32
    %c0_i32_1 = arith.constant 0 : i32
    return %c0_i32, %c0_i32_0 : i32, i32
  }
  func.func @transform_3(%arg0: i32, %arg1: i32) -> (i32, i32) {
    %c0_i32 = arith.constant 0 : i32
    %c0_i32_0 = arith.constant 0 : i32
    %c0_i32_1 = arith.constant 0 : i32
    return %c0_i32, %c0_i32_0 : i32, i32
  }
  func.func @transform_4(%arg0: i32, %arg1: i32) -> (i32, i32) {
    %c0_i32 = arith.constant 0 : i32
    %c0_i32_0 = arith.constant 0 : i32
    %c0_i32_1 = arith.constant 0 : i32
    return %c0_i32, %c0_i32_0 : i32, i32
  }
  func.func @transform_5(%arg0: i32, %arg1: i32) -> (i32, i32) {
    %c0_i32 = arith.constant 0 : i32
    %c0_i32_0 = arith.constant 0 : i32
    %c0_i32_1 = arith.constant 0 : i32
    return %c0_i32, %c0_i32_0 : i32, i32
  }
  func.func @transform_6(%arg0: i32, %arg1: i32) -> (i32, i32) {
    %c0_i32 = arith.constant 0 : i32
    %c0_i32_0 = arith.constant 0 : i32
    %c0_i32_1 = arith.constant 0 : i32
    return %c0_i32, %c0_i32_0 : i32, i32
  }
  func.func @transform_7(%arg0: i32, %arg1: i32) -> (i32, i32, i32) {
    %c0_i32 = arith.constant 0 : i32
    %c0_i32_0 = arith.constant 0 : i32
    return %arg0, %c0_i32, %arg1 : i32, i32, i32
  }
  func.func @transform_8(%arg0: i32, %arg1: i32) -> (i32, i32, i32) {
    %c0_i32 = arith.constant 0 : i32
    %c0_i32_0 = arith.constant 0 : i32
    return %arg0, %c0_i32, %arg1 : i32, i32, i32
  }
  func.func @transform_9(%arg0: i32, %arg1: i32) -> (i32, i32, i32) {
    %c0_i32 = arith.constant 0 : i32
    %c0_i32_0 = arith.constant 0 : i32
    return %arg0, %c0_i32, %arg1 : i32, i32, i32
  }
}

</mosaic_0001>

<llo_original>
// kernel: tpu_custom_call.1
$region0: #{tpu_custom_call.1}
  #allocation0 [shape = 'u32[]', space=smem, size = 0x4, offset = 0x4, fixed_abs, tag = 'smem constant byte address 0x4 - core index']
  #allocation1 [shape = 'u32[144,128]{1,0:T(1,128)}', space=vmem, size = 0x12000, scoped, tag = 'internal scratch']
  %s0 = inlined_call_operand.hbm [shape: f32[2,16,256], index: 0, kind: input, shape index: {}]
  %s1 = inlined_call_operand.vmem [shape: f32[2,16], index: 1, kind: input, shape index: {}]
  %s2 = inlined_call_operand.vmem [shape: f32[2,1], index: 2, kind: input, shape index: {}]
  %s3 = inlined_call_operand.vmem [shape: f32[2,16], index: 3, kind: input, shape index: {}]
  %s4 = inlined_call_operand.vmem [shape: f32[2,1], index: 4, kind: input, shape index: {}]
  %s5 = inlined_call_operand.vmem [shape: f32[16,16], index: 5, kind: input, shape index: {}]
  %s6 = inlined_call_operand.vmem [shape: f32[16,1], index: 6, kind: input, shape index: {}]
  %s7 = inlined_call_operand.hbm [shape: f32[2,2,256], index: 7, kind: output, shape index: {0}]
  %s8 = inlined_call_operand.hbm [shape: f32[2,2,256], index: 8, kind: output, shape index: {1}]
  %s9 = inlined_call_operand.hbm [shape: f32[2,16,256], index: 9, kind: output, shape index: {2}]
  %10 = xla_tuple %s7, %s8, %s9
  %s11 = sld [smem:[#allocation0]]
  $region81: #{tpu_custom_call.1} parent=0
    _
  %s13 = ssub.s32 1, %s11
  %s14 = scalar_select 0, %s13, %s11
  $region1: #{tpu_custom_call.1} parent=0
    #allocation2 [shape = 'u8[32768]{0}', space=vmem, size = 0x8000, scoped, tag = 'input window, operand 0']
    #allocation3 [shape = 's32[2]{0}', space=sflag, size = 0x8, scoped, tag = 'scoped memory for tpu_custom_call.1']
    #allocation4 [shape = 's32[2]{0}', space=sflag, size = 0x8, scoped, tag = 'scoped memory for tpu_custom_call.1']
    #allocation5 [shape = 'u8[4096]{0}', space=vmem, size = 0x1000, scoped, tag = 'output window, operand 0']
    #allocation6 [shape = 'u8[4096]{0}', space=vmem, size = 0x1000, scoped, tag = 'output window, operand 1']
    #allocation7 [shape = 's32[2]{0}', space=sflag, size = 0x8, scoped, tag = 'scoped memory for tpu_custom_call.1']
    #allocation8 [shape = 'u8[32768]{0}', space=vmem, size = 0x8000, scoped, tag = 'output window, operand 2']
    %15 = vsyncpa [#allocation3], 0
    %s16 = scalar_lea.sflag [#allocation3], 1
    %17 = vsyncpa %s16, 0
    %18 = vsyncpa [#allocation4], 0
    %s19 = scalar_lea.sflag [#allocation4], 1
    %20 = vsyncpa %s19, 0
    %21 = vsyncpa [#allocation7], 0
    %s22 = scalar_lea.sflag [#allocation7], 1
    %23 = vsyncpa %s22, 0
    loop: start=0, step=1, limit=4
    $region2: #{tpu_custom_call.1} parent=1 // loop_pre_header
      _
    $region3: #{tpu_custom_call.1} parent=1 // loop_header
      %s25 = sphi 0, %s29
      %p26 = scmp.ge.s32.totalorder %s25, 4
      %s32 = sphi 0, %s44
      %s33 = sphi 0, %s40
      %s34 = sphi 0, %s32
      %s35 = sphi 0, %s33
      %s36 = sphi 0, %s34
      %s37 = sphi 0, %s35
      %s49 = sphi 0, %s51
      %s52 = sphi 0, %s49
      %s53 = sphi 0, %s52
      %s69 = sphi 0, %s53
      %s73 = sphi 0, %s73
      %s75 = sphi 0, %s73
      %s76 = sphi 0, %s75
      %s90 = sphi 0, %s76
      %s94 = sphi 0, %s94
      %s96 = sphi 0, %s94
      %s97 = sphi 0, %s96
      %s111 = sphi 0, %s97
      %s115 = sphi 0, %s115
      %s117 = sphi 0, %s115
      %s118 = sphi 0, %s117
      %s132 = sphi 0, %s118
      %s136 = sphi 0, %s136
      %s138 = sphi 0, %s136
      %s139 = sphi 0, %s138
      %s153 = sphi 0, %s139
      %s157 = sphi 0, %s157
      %s159 = sphi 0, %s157
      %s160 = sphi 0, %s159
      %s174 = sphi 0, %s160
      %s178 = sphi 0, %s178
      %s180 = sphi 0, %s178
      %s181 = sphi 0, %s180
      %s195 = sphi 0, %s181
      %s203 = sphi 0, %s205
      %s206 = sphi 0, %s203
      %s207 = sphi 0, %s206
      %s223 = sphi 0, %s207
      %s231 = sphi 0, %s233
      %s234 = sphi 0, %s231
      %s235 = sphi 0, %s234
      %s251 = sphi 0, %s235
      %s259 = sphi 0, %s261
      %s262 = sphi 0, %s259
      %s263 = sphi 0, %s262
      %s279 = sphi 0, %s263
    $region4: #{tpu_custom_call.1} parent=1 // loop_header_branch
      %28 = sbr.rel (%p26) target = $region8
    $region5: #{tpu_custom_call.1} parent=1 // loop_body
      %s30 = ssub.s32 %s25, 1
      %s31 = ssub.s32 %s25, 2
      %s38 = sadd.s32 1, %s33
      %p39 = scmp.ge.s32.totalorder %s38, 1
      %s40 = scalar_select %p39, 0, %s38
      %s41 = sadd.s32 1, %s32
      %s42 = scalar_select %p39, %s41, %s32
      %p43 = scmp.ge.s32.totalorder %s42, 2
      %s44 = scalar_select %p43, 0, %s42
      %s45 = ssub.s32 %s32, %s44
      %s46 = ssub.s32 %s33, %s40
      %s47 = sor.u32 %s45, %s46
      %p48 = scmp.eq.s32.totalorder %s47, 0
      %s50 = sadd.s32 %s49, 1
      %s51 = scalar_select %p48, %s49, %s50
      %p54 = pneg %p48
      %p55 = scmp.eq.s32.totalorder %s25, 1
      %p56 = por %p54, %p55
      %p57 = scmp.ne.s32.totalorder %s49, %s52
      %p58 = scmp.eq.s32.totalorder %s25, 0
      %p59 = por %p57, %p58
      %p60 = scmp.ne.s32.totalorder %s49, %s52
      %p61 = scmp.eq.s32.totalorder %s30, 1
      %p62 = por %p60, %p61
      %p63 = scmp.ne.s32.totalorder %s52, %s53
      %p64 = scmp.eq.s32.totalorder %s30, 0
      %p65 = por %p63, %p64
      %p66 = scmp.ne.s32.totalorder %s52, %s53
      %p67 = scmp.eq.s32.totalorder %s31, 1
      %p68 = por %p66, %p67
      %p70 = scmp.ne.s32.totalorder %s53, %s69
      %p71 = scmp.eq.s32.totalorder %s31, 0
      %p72 = por %p70, %p71
      %s74 = sadd.s32 %s73, 1
      %p77 = scmp.eq.s32.totalorder %s25, 1
      %p78 = scmp.ne.s32.totalorder %s73, %s75
      %p79 = scmp.eq.s32.totalorder %s25, 0
      %p80 = por %p78, %p79
      %p81 = scmp.ne.s32.totalorder %s73, %s75
      %p82 = scmp.eq.s32.totalorder %s30, 1
      %p83 = por %p81, %p82
      %p84 = scmp.ne.s32.totalorder %s75, %s76
      %p85 = scmp.eq.s32.totalorder %s30, 0
      %p86 = por %p84, %p85
      %p87 = scmp.ne.s32.totalorder %s75, %s76
      %p88 = scmp.eq.s32.totalorder %s31, 1
      %p89 = por %p87, %p88
      %p91 = scmp.ne.s32.totalorder %s76, %s90
      %p92 = scmp.eq.s32.totalorder %s31, 0
      %p93 = por %p91, %p92
      %s95 = sadd.s32 %s94, 1
      %p98 = scmp.eq.s32.totalorder %s25, 1
      %p99 = scmp.ne.s32.totalorder %s94, %s96
      %p100 = scmp.eq.s32.totalorder %s25, 0
      %p101 = por %p99, %p100
      %p102 = scmp.ne.s32.totalorder %s94, %s96
      %p103 = scmp.eq.s32.totalorder %s30, 1
      %p104 = por %p102, %p103
      %p105 = scmp.ne.s32.totalorder %s96, %s97
      %p106 = scmp.eq.s32.totalorder %s30, 0
      %p107 = por %p105, %p106
      %p108 = scmp.ne.s32.totalorder %s96, %s97
      %p109 = scmp.eq.s32.totalorder %s31, 1
      %p110 = por %p108, %p109
      %p112 = scmp.ne.s32.totalorder %s97, %s111
      %p113 = scmp.eq.s32.totalorder %s31, 0
      %p114 = por %p112, %p113
      %s116 = sadd.s32 %s115, 1
      %p119 = scmp.eq.s32.totalorder %s25, 1
      %p120 = scmp.ne.s32.totalorder %s115, %s117
      %p121 = scmp.eq.s32.totalorder %s25, 0
      %p122 = por %p120, %p121
      %p123 = scmp.ne.s32.totalorder %s115, %s117
      %p124 = scmp.eq.s32.totalorder %s30, 1
      %p125 = por %p123, %p124
      %p126 = scmp.ne.s32.totalorder %s117, %s118
      %p127 = scmp.eq.s32.totalorder %s30, 0
      %p128 = por %p126, %p127
      %p129 = scmp.ne.s32.totalorder %s117, %s118
      %p130 = scmp.eq.s32.totalorder %s31, 1
      %p131 = por %p129, %p130
      %p133 = scmp.ne.s32.totalorder %s118, %s132
      %p134 = scmp.eq.s32.totalorder %s31, 0
      %p135 = por %p133, %p134
      %s137 = sadd.s32 %s136, 1
      %p140 = scmp.eq.s32.totalorder %s25, 1
      %p141 = scmp.ne.s32.totalorder %s136, %s138
      %p142 = scmp.eq.s32.totalorder %s25, 0
      %p143 = por %p141, %p142
      %p144 = scmp.ne.s32.totalorder %s136, %s138
      %p145 = scmp.eq.s32.totalorder %s30, 1
      %p146 = por %p144, %p145
      %p147 = scmp.ne.s32.totalorder %s138, %s139
      %p148 = scmp.eq.s32.totalorder %s30, 0
      %p149 = por %p147, %p148
      %p150 = scmp.ne.s32.totalorder %s138, %s139
      %p151 = scmp.eq.s32.totalorder %s31, 1
      %p152 = por %p150, %p151
      %p154 = scmp.ne.s32.totalorder %s139, %s153
      %p155 = scmp.eq.s32.totalorder %s31, 0
      %p156 = por %p154, %p155
      %s158 = sadd.s32 %s157, 1
      %p161 = scmp.eq.s32.totalorder %s25, 1
      %p162 = scmp.ne.s32.totalorder %s157, %s159
      %p163 = scmp.eq.s32.totalorder %s25, 0
      %p164 = por %p162, %p163
      %p165 = scmp.ne.s32.totalorder %s157, %s159
      %p166 = scmp.eq.s32.totalorder %s30, 1
      %p167 = por %p165, %p166
      %p168 = scmp.ne.s32.totalorder %s159, %s160
      %p169 = scmp.eq.s32.totalorder %s30, 0
      %p170 = por %p168, %p169
      %p171 = scmp.ne.s32.totalorder %s159, %s160
      %p172 = scmp.eq.s32.totalorder %s31, 1
      %p173 = por %p171, %p172
      %p175 = scmp.ne.s32.totalorder %s160, %s174
      %p176 = scmp.eq.s32.totalorder %s31, 0
      %p177 = por %p175, %p176
      %s179 = sadd.s32 %s178, 1
      %p182 = scmp.eq.s32.totalorder %s25, 1
      %p183 = scmp.ne.s32.totalorder %s178, %s180
      %p184 = scmp.eq.s32.totalorder %s25, 0
      %p185 = por %p183, %p184
      %p186 = scmp.ne.s32.totalorder %s178, %s180
      %p187 = scmp.eq.s32.totalorder %s30, 1
      %p188 = por %p186, %p187
      %p189 = scmp.ne.s32.totalorder %s180, %s181
      %p190 = scmp.eq.s32.totalorder %s30, 0
      %p191 = por %p189, %p190
      %p192 = scmp.ne.s32.totalorder %s180, %s181
      %p193 = scmp.eq.s32.totalorder %s31, 1
      %p194 = por %p192, %p193
      %p196 = scmp.ne.s32.totalorder %s181, %s195
      %p197 = scmp.eq.s32.totalorder %s31, 0
      %p198 = por %p196, %p197
      %s199 = ssub.s32 %s32, %s44
      %s200 = ssub.s32 %s33, %s40
      %s201 = sor.u32 %s199, %s200
      %p202 = scmp.eq.s32.totalorder %s201, 0
      %s204 = sadd.s32 %s203, 1
      %s205 = scalar_select %p202, %s203, %s204
      %p208 = pneg %p202
      %p209 = scmp.eq.s32.totalorder %s25, 1
      %p210 = por %p208, %p209
      %p211 = scmp.ne.s32.totalorder %s203, %s206
      %p212 = scmp.eq.s32.totalorder %s25, 0
      %p213 = por %p211, %p212
      %p214 = scmp.ne.s32.totalorder %s203, %s206
      %p215 = scmp.eq.s32.totalorder %s30, 1
      %p216 = por %p214, %p215
      %p217 = scmp.ne.s32.totalorder %s206, %s207
      %p218 = scmp.eq.s32.totalorder %s30, 0
      %p219 = por %p217, %p218
      %p220 = scmp.ne.s32.totalorder %s206, %s207
      %p221 = scmp.eq.s32.totalorder %s31, 1
      %p222 = por %p220, %p221
      %p224 = scmp.ne.s32.totalorder %s207, %s223
      %p225 = scmp.eq.s32.totalorder %s31, 0
      %p226 = por %p224, %p225
      %s227 = ssub.s32 %s32, %s44
      %s228 = ssub.s32 %s33, %s40
      %s229 = sor.u32 %s227, %s228
      %p230 = scmp.eq.s32.totalorder %s229, 0
      %s232 = sadd.s32 %s231, 1
      %s233 = scalar_select %p230, %s231, %s232
      %p236 = pneg %p230
      %p237 = scmp.eq.s32.totalorder %s25, 1
      %p238 = por %p236, %p237
      %p239 = scmp.ne.s32.totalorder %s231, %s234
      %p240 = scmp.eq.s32.totalorder %s25, 0
      %p241 = por %p239, %p240
      %p242 = scmp.ne.s32.totalorder %s231, %s234
      %p243 = scmp.eq.s32.totalorder %s30, 1
      %p244 = por %p242, %p243
      %p245 = scmp.ne.s32.totalorder %s234, %s235
      %p246 = scmp.eq.s32.totalorder %s30, 0
      %p247 = por %p245, %p246
      %p248 = scmp.ne.s32.totalorder %s234, %s235
      %p249 = scmp.eq.s32.totalorder %s31, 1
      %p250 = por %p248, %p249
      %p252 = scmp.ne.s32.totalorder %s235, %s251
      %p253 = scmp.eq.s32.totalorder %s31, 0
      %p254 = por %p252, %p253
      %s255 = ssub.s32 %s32, %s44
      %s256 = ssub.s32 %s33, %s40
      %s257 = sor.u32 %s255, %s256
      %p258 = scmp.eq.s32.totalorder %s257, 0
      %s260 = sadd.s32 %s259, 1
      %s261 = scalar_select %p258, %s259, %s260
      %p264 = pneg %p258
      %p265 = scmp.eq.s32.totalorder %s25, 1
      %p266 = por %p264, %p265
      %p267 = scmp.ne.s32.totalorder %s259, %s262
      %p268 = scmp.eq.s32.totalorder %s25, 0
      %p269 = por %p267, %p268
      %p270 = scmp.ne.s32.totalorder %s259, %s262
      %p271 = scmp.eq.s32.totalorder %s30, 1
      %p272 = por %p270, %p271
      %p273 = scmp.ne.s32.totalorder %s262, %s263
      %p274 = scmp.eq.s32.totalorder %s30, 0
      %p275 = por %p273, %p274
      %p276 = scmp.ne.s32.totalorder %s262, %s263
      %p277 = scmp.eq.s32.totalorder %s31, 1
      %p278 = por %p276, %p277
      %p280 = scmp.ne.s32.totalorder %s263, %s279
      %p281 = scmp.eq.s32.totalorder %s31, 0
      %p282 = por %p280, %p281
      %p283 = scmp.le.s32.totalorder 1, %s25
      %p284 = scmp.lt.s32.totalorder %s25, 3
      %p285 = pnand %p283, %p284
      %p286 = pneg %p285
      // Predicated region
      $region9: #{tpu_custom_call.1} parent=5 // pred_check
        _
      $region10: #{tpu_custom_call.1} parent=5 // pred_check_branch
        %288 = sbr.rel (%p285) target = $region12
      $region11: #{tpu_custom_call.1} parent=5 // pred_region
        %s289 = ssub.s32 %s25, 1
        // Predicated region
        $region13: #{tpu_custom_call.1} parent=11 // pred_check
          %p290 = pneg %p86
        $region14: #{tpu_custom_call.1} parent=11 // pred_check_branch
          %292 = sbr.rel (%p290) target = $region16
        $region15: #{tpu_custom_call.1} parent=11 // pred_region
          _
        $region16: #{tpu_custom_call.1} parent=11 // pred_fallthru
          _
        // Predicated region
        $region17: #{tpu_custom_call.1} parent=11 // pred_check
          %p293 = pneg %p107
        $region18: #{tpu_custom_call.1} parent=11 // pred_check_branch
          %295 = sbr.rel (%p293) target = $region20
        $region19: #{tpu_custom_call.1} parent=11 // pred_region
          _
        $region20: #{tpu_custom_call.1} parent=11 // pred_fallthru
          _
        // Predicated region
        $region21: #{tpu_custom_call.1} parent=11 // pred_check
          %p296 = pneg %p128
        $region22: #{tpu_custom_call.1} parent=11 // pred_check_branch
          %298 = sbr.rel (%p296) target = $region24
        $region23: #{tpu_custom_call.1} parent=11 // pred_region
          _
        $region24: #{tpu_custom_call.1} parent=11 // pred_fallthru
          _
        // Predicated region
        $region25: #{tpu_custom_call.1} parent=11 // pred_check
          %p299 = pneg %p149
        $region26: #{tpu_custom_call.1} parent=11 // pred_check_branch
          %301 = sbr.rel (%p299) target = $region28
        $region27: #{tpu_custom_call.1} parent=11 // pred_region
          _
        $region28: #{tpu_custom_call.1} parent=11 // pred_fallthru
          _
        // Predicated region
        $region29: #{tpu_custom_call.1} parent=11 // pred_check
          %p302 = pneg %p170
        $region30: #{tpu_custom_call.1} parent=11 // pred_check_branch
          %304 = sbr.rel (%p302) target = $region32
        $region31: #{tpu_custom_call.1} parent=11 // pred_region
          _
        $region32: #{tpu_custom_call.1} parent=11 // pred_fallthru
          _
        // Predicated region
        $region33: #{tpu_custom_call.1} parent=11 // pred_check
          %p305 = pneg %p191
        $region34: #{tpu_custom_call.1} parent=11 // pred_check_branch
          %307 = sbr.rel (%p305) target = $region36
        $region35: #{tpu_custom_call.1} parent=11 // pred_region
          _
        $region36: #{tpu_custom_call.1} parent=11 // pred_fallthru
          _
      $region12: #{tpu_custom_call.1} parent=5 // pred_fallthru
        _
      %p308 = scmp.lt.s32.totalorder %s25, 2
      // Predicated region
      $region37: #{tpu_custom_call.1} parent=5 // pred_check
        %p309 = pneg %p308
      $region38: #{tpu_custom_call.1} parent=5 // pred_check_branch
        %311 = sbr.rel (%p309) target = $region40
      $region39: #{tpu_custom_call.1} parent=5 // pred_region
        // Predicated region
        $region41: #{tpu_custom_call.1} parent=39 // pred_check
          %p312 = pneg %p59
        $region42: #{tpu_custom_call.1} parent=39 // pred_check_branch
          %314 = sbr.rel (%p312) target = $region44
        $region43: #{tpu_custom_call.1} parent=39 // pred_region
          %s315 = sand.u32 %s49, 1
          %s316 = scalar_lea.sflag [#allocation3], %s315
          %s317 = sand.u32 %s49, 1
          %s318 = smul.addr %s317, 32
          %s319 = scalar_lea.vmem [#allocation2], %s318
          %s320 = smul.u32 2, %s33
          %s322 = ssub.s32 512, 512
          %323 = vsyncadd %s316, %s322
          %s324 = smul.addr %s32, 4
          %s325 = sadd.s32 %s320, %s324
          %s326 = smul.addr %s325, 128
          %s327 = scalar_lea.hbm %s0, %s326
          %s328 = sshll.u32 %s319, 4
          %s329 = int_to_ptr.vmem [resolvable:$true] %s328
          %334 = dma.hbm_to_vmem [thread:$0]  %s327, 512, %s329, %s316, 256, 256, 16
        $region44: #{tpu_custom_call.1} parent=39 // pred_fallthru
          _
      $region40: #{tpu_custom_call.1} parent=5 // pred_fallthru
        _
      %p335 = scmp.le.s32.totalorder 1, %s25
      %p336 = scmp.lt.s32.totalorder %s25, 3
      %p337 = pnand %p335, %p336
      %p338 = pneg %p337
      // Predicated region
      $region45: #{tpu_custom_call.1} parent=5 // pred_check
        _
      $region46: #{tpu_custom_call.1} parent=5 // pred_check_branch
        %340 = sbr.rel (%p337) target = $region48
      $region47: #{tpu_custom_call.1} parent=5 // pred_region
        %s341 = ssub.s32 %s25, 1
        %s342 = sand.u32 %s52, 1
        %s343 = scalar_lea.sflag [#allocation3], %s342
        %s344 = sand.u32 %s52, 1
        %s345 = smul.addr %s344, 32
        %s346 = scalar_lea.vmem [#allocation2], %s345
        // Predicated region
        $region49: #{tpu_custom_call.1} parent=47 // pred_check
          %p347 = pneg %p65
        $region50: #{tpu_custom_call.1} parent=47 // pred_check_branch
          %349 = sbr.rel (%p347) target = $region52
        $region51: #{tpu_custom_call.1} parent=47 // pred_region
          %350 = dma.done %s343, 512
        $region52: #{tpu_custom_call.1} parent=47 // pred_fallthru
          _
        %s351 = sand.u32 %s52, 1
        %s352 = scalar_lea.sflag [#allocation3], %s351
        %s353 = sand.u32 %s52, 1
        %s354 = smul.addr %s353, 32
        %s355 = scalar_lea.vmem [#allocation2], %s354
        %p356 = pneg %p65
        %p357 = pneg %p62
        %p358 = pneg %p86
        %p359 = pneg %p83
        %p360 = pneg %p107
        %p361 = pneg %p104
        %p362 = pneg %p128
        %p363 = pneg %p125
        %p364 = pneg %p149
        %p365 = pneg %p146
        %p366 = pneg %p170
        %p367 = pneg %p167
        %p368 = pneg %p191
        %p369 = pneg %p188
        %p370 = pneg %p219
        %p371 = pneg %p216
        %s372 = sand.u32 %s206, 1
        %s373 = scalar_lea.sflag [#allocation4], %s372
        %s374 = sand.u32 %s206, 1
        %s375 = smul.addr %s374, 4
        %s376 = scalar_lea.vmem [#allocation5], %s375
        %p377 = pneg %p247
        %p378 = pneg %p244
        %s379 = sand.u32 %s30, 1
        %s380 = scalar_lea.sflag [#allocation7], %s379
        %s381 = sand.u32 %s234, 1
        %s382 = smul.addr %s381, 4
        %s383 = scalar_lea.vmem [#allocation6], %s382
        %p384 = pneg %p275
        %p385 = pneg %p272
        %s386 = sand.u32 %s30, 1
        %s387 = scalar_lea.sflag [#allocation7], %s386
        %s388 = sand.u32 %s262, 1
        %s389 = smul.addr %s388, 32
        %s390 = scalar_lea.vmem [#allocation8], %s389
        %s391 = smul.u32 2, %s35
        %s392 = smul.u32 2, %s35
        %s393 = smul.u32 2, %s35
        %s394 = smul.u32 2, %s35
        %v395 = vld [vmem:[%s1] sm:$0x3]
        %v396 = vld [vmem:[%s3] sm:$0x3]
        %v397 = vld [vmem:[%s5] sm:$0xff]
        %v398 = vld [vmem:[%s5 + $0x8] sm:$0xff]
        %v399 = vld [vmem:[%s346] sm:$0xff]
        %v400 = vld [vmem:[%s346 + $0x8] sm:$0xff]
        %v401 = vld [vmem:[%s346 + $0x10] sm:$0xff]
        %v402 = vld [vmem:[%s346 + $0x18] sm:$0xff]
        %v403 = vld [vmem:[%s2] sm:$0x3]
        %405 = vset.pattern.permute.xlu0 0
        %406 = vperm.xlu0 %405, %v403
        %v407 = vpop.permute.xlu0 %406
        %vm409 = vcmask 130048
        %v411 = vsel %vm409, %v395, 0
        %413 = vmatprep.subr.mxu0 %v400
        %414 = vmatpush1.msra.mxu0 %v399
        %415 = vmatprep.subr.mxu0 %v402
        %416 = vmatpush1.msra.mxu0 %v401
        %417 = vmatprep.subr.mxu0 0.0
        %418 = vmatpush1.msra.mxu0 0.0
        %419 = vmatprep.subr.mxu0 0.0
        %420 = vmatpush1.msra.mxu0 0.0
        %421 = vmatprep.subr.mxu0 0.0
        %422 = vmatpush1.msra.mxu0 0.0
        %423 = vmatprep.subr.mxu0 0.0
        %424 = vmatpush1.msra.mxu0 0.0
        %425 = vmatprep.subr.mxu0 0.0
        %426 = vmatpush1.msra.mxu0 0.0
        %427 = vmatprep.subr.mxu0 0.0
        %428 = vmatpush1.msra.mxu0 0.0
        %429 = vmatprep.subr.mxu0 0.0
        %430 = vmatpush1.msra.mxu0 0.0
        %431 = vmatprep.subr.mxu0 0.0
        %432 = vmatpush1.msra.mxu0 0.0
        %433 = vmatprep.subr.mxu0 0.0
        %434 = vmatpush1.msra.mxu0 0.0
        %435 = vmatprep.subr.mxu0 0.0
        %436 = vmatpush1.msra.mxu0 0.0
        %437 = vmatprep.subr.mxu0 0.0
        %438 = vmatpush1.msra.mxu0 0.0
        %439 = vmatprep.subr.mxu0 0.0
        %440 = vmatpush1.msra.mxu0 0.0
        %441 = vmatprep.subr.mxu0 0.0
        %442 = vmatpush1.msra.mxu0 0.0
        %443 = vmatprep.subr.mxu0 0.0
        %444 = vmatpush1.msra.mxu0 0.0
        %445 = vmatprep.subr.mxu0 0.0
        %446 = vmatpush1.msra.mxu0 0.0
        %447 = vmatprep.subr.mxu0 0.0
        %448 = vmatpush1.msra.mxu0 0.0
        %449 = vmatprep.subr.mxu0 0.0
        %450 = vmatpush1.msra.mxu0 0.0
        %451 = vmatprep.subr.mxu0 0.0
        %452 = vmatpush1.msra.mxu0 0.0
        %453 = vmatprep.subr.mxu0 0.0
        %454 = vmatpush1.msra.mxu0 0.0
        %455 = vmatprep.subr.mxu0 0.0
        %456 = vmatpush1.msra.mxu0 0.0
        %457 = vmatprep.subr.mxu0 0.0
        %458 = vmatpush1.msra.mxu0 0.0
        %459 = vmatprep.subr.mxu0 0.0
        %460 = vmatpush1.msra.mxu0 0.0
        %461 = vmatprep.subr.mxu0 0.0
        %462 = vmatpush1.msra.mxu0 0.0
        %463 = vmatprep.subr.mxu0 0.0
        %464 = vmatpush1.msra.mxu0 0.0
        %465 = vmatprep.subr.mxu0 0.0
        %466 = vmatpush1.msra.mxu0 0.0
        %467 = vmatprep.subr.mxu0 0.0
        %468 = vmatpush1.msra.mxu0 0.0
        %469 = vmatprep.subr.mxu0 0.0
        %470 = vmatpush1.msra.mxu0 0.0
        %471 = vmatprep.subr.mxu0 0.0
        %472 = vmatpush1.msra.mxu0 0.0
        %473 = vmatprep.subr.mxu0 0.0
        %474 = vmatpush1.msra.mxu0 0.0
        %475 = vmatprep.subr.mxu0 0.0
        %476 = vmatpush1.msra.mxu0 0.0
        %477 = vmatprep.mubr.f32.mxu0 0.0
        %478 = vmatmul.mubr.f32.gmra.mrb[0].mxu0 %v411
        %v479 = vpop.f32.mrb[0].mxu0
        %v480 = vadd.f32 %v407, %v479
        %v481 = vpop.f32.mrb[0].mxu0
        %v482 = vadd.f32 %v407, %v481
        %483 = vdwg.mxu0
        %v484 = vld [vmem:[%s4] sm:$0x3]
        %486 = vset.pattern.permute.xlu0 0
        %487 = vperm.xlu0 %486, %v484
        %v488 = vpop.permute.xlu0 %487
        %v491 = vsel %vm409, %v396, 0
        %493 = vmatprep.subr.mxu0 %v400
        %494 = vmatpush1.msra.mxu0 %v399
        %495 = vmatprep.subr.mxu0 %v402
        %496 = vmatpush1.msra.mxu0 %v401
        %497 = vmatprep.subr.mxu0 0.0
        %498 = vmatpush1.msra.mxu0 0.0
        %499 = vmatprep.subr.mxu0 0.0
        %500 = vmatpush1.msra.mxu0 0.0
        %501 = vmatprep.subr.mxu0 0.0
        %502 = vmatpush1.msra.mxu0 0.0
        %503 = vmatprep.subr.mxu0 0.0
        %504 = vmatpush1.msra.mxu0 0.0
        %505 = vmatprep.subr.mxu0 0.0
        %506 = vmatpush1.msra.mxu0 0.0
        %507 = vmatprep.subr.mxu0 0.0
        %508 = vmatpush1.msra.mxu0 0.0
        %509 = vmatprep.subr.mxu0 0.0
        %510 = vmatpush1.msra.mxu0 0.0
        %511 = vmatprep.subr.mxu0 0.0
        %512 = vmatpush1.msra.mxu0 0.0
        %513 = vmatprep.subr.mxu0 0.0
        %514 = vmatpush1.msra.mxu0 0.0
        %515 = vmatprep.subr.mxu0 0.0
        %516 = vmatpush1.msra.mxu0 0.0
        %517 = vmatprep.subr.mxu0 0.0
        %518 = vmatpush1.msra.mxu0 0.0
        %519 = vmatprep.subr.mxu0 0.0
        %520 = vmatpush1.msra.mxu0 0.0
        %521 = vmatprep.subr.mxu0 0.0
        %522 = vmatpush1.msra.mxu0 0.0
        %523 = vmatprep.subr.mxu0 0.0
        %524 = vmatpush1.msra.mxu0 0.0
        %525 = vmatprep.subr.mxu0 0.0
        %526 = vmatpush1.msra.mxu0 0.0
        %527 = vmatprep.subr.mxu0 0.0
        %528 = vmatpush1.msra.mxu0 0.0
        %529 = vmatprep.subr.mxu0 0.0
        %530 = vmatpush1.msra.mxu0 0.0
        %531 = vmatprep.subr.mxu0 0.0
        %532 = vmatpush1.msra.mxu0 0.0
        %533 = vmatprep.subr.mxu0 0.0
        %534 = vmatpush1.msra.mxu0 0.0
        %535 = vmatprep.subr.mxu0 0.0
        %536 = vmatpush1.msra.mxu0 0.0
        %537 = vmatprep.subr.mxu0 0.0
        %538 = vmatpush1.msra.mxu0 0.0
        %539 = vmatprep.subr.mxu0 0.0
        %540 = vmatpush1.msra.mxu0 0.0
        %541 = vmatprep.subr.mxu0 0.0
        %542 = vmatpush1.msra.mxu0 0.0
        %543 = vmatprep.subr.mxu0 0.0
        %544 = vmatpush1.msra.mxu0 0.0
        %545 = vmatprep.subr.mxu0 0.0
        %546 = vmatpush1.msra.mxu0 0.0
        %547 = vmatprep.subr.mxu0 0.0
        %548 = vmatpush1.msra.mxu0 0.0
        %549 = vmatprep.subr.mxu0 0.0
        %550 = vmatpush1.msra.mxu0 0.0
        %551 = vmatprep.subr.mxu0 0.0
        %552 = vmatpush1.msra.mxu0 0.0
        %553 = vmatprep.subr.mxu0 0.0
        %554 = vmatpush1.msra.mxu0 0.0
        %555 = vmatprep.subr.mxu0 0.0
        %556 = vmatpush1.msra.mxu0 0.0
        %557 = vmatprep.mubr.f32.mxu0 0.0
        %558 = vmatmul.mubr.f32.gmra.mrb[0].mxu0 %v491
        %v559 = vpop.f32.mrb[0].mxu0
        %v560 = vadd.f32 %v488, %v559
        %v561 = vpop.f32.mrb[0].mxu0
        %v562 = vadd.f32 %v488, %v561
        %563 = vdwg.mxu0
        %v564 = vld [vmem:[%s6] sm:$0xff]
        %v565 = vld [vmem:[%s6 + $0x8] sm:$0xff]
        %567 = vset.pattern.permute.xlu0 0
        %568 = vperm.xlu0 %567, %v564
        %v569 = vpop.permute.xlu0 %568
        %572 = vset.pattern.permute.xlu0 0
        %573 = vperm.xlu0 %572, %v565
        %v574 = vpop.permute.xlu0 %573
        %v577 = vsel %vm409, %v397, 0
        %v580 = vsel %vm409, %v398, 0
        %582 = vmatprep.subr.mxu0 %v400
        %583 = vmatpush1.msra.mxu0 %v399
        %584 = vmatprep.subr.mxu0 %v402
        %585 = vmatpush1.msra.mxu0 %v401
        %586 = vmatprep.subr.mxu0 0.0
        %587 = vmatpush1.msra.mxu0 0.0
        %588 = vmatprep.subr.mxu0 0.0
        %589 = vmatpush1.msra.mxu0 0.0
        %590 = vmatprep.subr.mxu0 0.0
        %591 = vmatpush1.msra.mxu0 0.0
        %592 = vmatprep.subr.mxu0 0.0
        %593 = vmatpush1.msra.mxu0 0.0
        %594 = vmatprep.subr.mxu0 0.0
        %595 = vmatpush1.msra.mxu0 0.0
        %596 = vmatprep.subr.mxu0 0.0
        %597 = vmatpush1.msra.mxu0 0.0
        %598 = vmatprep.subr.mxu0 0.0
        %599 = vmatpush1.msra.mxu0 0.0
        %600 = vmatprep.subr.mxu0 0.0
        %601 = vmatpush1.msra.mxu0 0.0
        %602 = vmatprep.subr.mxu0 0.0
        %603 = vmatpush1.msra.mxu0 0.0
        %604 = vmatprep.subr.mxu0 0.0
        %605 = vmatpush1.msra.mxu0 0.0
        %606 = vmatprep.subr.mxu0 0.0
        %607 = vmatpush1.msra.mxu0 0.0
        %608 = vmatprep.subr.mxu0 0.0
        %609 = vmatpush1.msra.mxu0 0.0
        %610 = vmatprep.subr.mxu0 0.0
        %611 = vmatpush1.msra.mxu0 0.0
        %612 = vmatprep.subr.mxu0 0.0
        %613 = vmatpush1.msra.mxu0 0.0
        %614 = vmatprep.subr.mxu0 0.0
        %615 = vmatpush1.msra.mxu0 0.0
        %616 = vmatprep.subr.mxu0 0.0
        %617 = vmatpush1.msra.mxu0 0.0
        %618 = vmatprep.subr.mxu0 0.0
        %619 = vmatpush1.msra.mxu0 0.0
        %620 = vmatprep.subr.mxu0 0.0
        %621 = vmatpush1.msra.mxu0 0.0
        %622 = vmatprep.subr.mxu0 0.0
        %623 = vmatpush1.msra.mxu0 0.0
        %624 = vmatprep.subr.mxu0 0.0
        %625 = vmatpush1.msra.mxu0 0.0
        %626 = vmatprep.subr.mxu0 0.0
        %627 = vmatpush1.msra.mxu0 0.0
        %628 = vmatprep.subr.mxu0 0.0
        %629 = vmatpush1.msra.mxu0 0.0
        %630 = vmatprep.subr.mxu0 0.0
        %631 = vmatpush1.msra.mxu0 0.0
        %632 = vmatprep.subr.mxu0 0.0
        %633 = vmatpush1.msra.mxu0 0.0
        %634 = vmatprep.subr.mxu0 0.0
        %635 = vmatpush1.msra.mxu0 0.0
        %636 = vmatprep.subr.mxu0 0.0
        %637 = vmatpush1.msra.mxu0 0.0
        %638 = vmatprep.subr.mxu0 0.0
        %639 = vmatpush1.msra.mxu0 0.0
        %640 = vmatprep.subr.mxu0 0.0
        %641 = vmatpush1.msra.mxu0 0.0
        %642 = vmatprep.subr.mxu0 0.0
        %643 = vmatpush1.msra.mxu0 0.0
        %644 = vmatprep.subr.mxu0 0.0
        %645 = vmatpush1.msra.mxu0 0.0
        %646 = vmatprep.mubr.f32.mxu0 0.0
        %647 = vmatmul.mubr.f32.gmra.mrb[0].mxu0 %v577
        %v648 = vpop.f32.mrb[0].mxu0
        %v649 = vadd.f32 %v569, %v648
        %v650 = vpop.f32.mrb[0].mxu0
        %v651 = vadd.f32 %v569, %v650
        %652 = vmatprep.mubr.f32.mxu0 0.0
        %653 = vmatmul.mubr.f32.gmra.mrb[0].mxu0 %v580
        %v654 = vpop.f32.mrb[0].mxu0
        %v655 = vadd.f32 %v574, %v654
        %v656 = vpop.f32.mrb[0].mxu0
        %v657 = vadd.f32 %v574, %v656
        %658 = vdwg.mxu0
        %v661 = vcombine.low %v480, %v482
        %v663 = vunpack.c.l.s4 1983009808
        %v664 = vunpack.c.0.s8 %v663
        %v665 = vlaneseq
        %v666 = vshrl.u32 %v665, 7
        %v667 = vsub.s32 %v664, %v666
        %v668 = vrot.slane %v661, %v667
        %670 = vst [vmem:[%s376] sm:$0xf] %v668
        %v673 = vcombine.low %v560, %v562
        %v675 = vunpack.c.l.s4 1983009808
        %v676 = vunpack.c.0.s8 %v675
        %v677 = vlaneseq
        %v678 = vshrl.u32 %v677, 7
        %v679 = vsub.s32 %v676, %v678
        %v680 = vrot.slane %v673, %v679
        %682 = vst [vmem:[%s383] sm:$0xf] %v680
        %683 = vst [vmem:[%s390] sm:$0xff] %v649
        %684 = vst [vmem:[%s390 + $0x8] sm:$0xff] %v651
        %685 = vst [vmem:[%s390 + $0x10] sm:$0xff] %v655
        %686 = vst [vmem:[%s390 + $0x18] sm:$0xff] %v657
        %s687 = sand.u32 %s206, 1
        %s688 = scalar_lea.sflag [#allocation4], %s687
        %s689 = sand.u32 %s206, 1
        %s690 = smul.addr %s689, 4
        %s691 = scalar_lea.vmem [#allocation5], %s690
        %s692 = sand.u32 %s30, 1
        %s693 = scalar_lea.sflag [#allocation7], %s692
        %s694 = sand.u32 %s234, 1
        %s695 = smul.addr %s694, 4
        %s696 = scalar_lea.vmem [#allocation6], %s695
        %s697 = sand.u32 %s30, 1
        %s698 = scalar_lea.sflag [#allocation7], %s697
        %s699 = sand.u32 %s262, 1
        %s700 = smul.addr %s699, 32
        %s701 = scalar_lea.vmem [#allocation8], %s700
        // Predicated region
        $region53: #{tpu_custom_call.1} parent=47 // pred_check
          %p702 = pneg %p216
        $region54: #{tpu_custom_call.1} parent=47 // pred_check_branch
          %704 = sbr.rel (%p702) target = $region56
        $region55: #{tpu_custom_call.1} parent=47 // pred_region
          %s705 = smul.u32 2, %s35
          %s707 = ssub.s32 64, 64
          %708 = vsyncadd %s688, %s707
          %s709 = smul.addr %s34, 2
          %s710 = sadd.s32 %s705, %s709
          %s711 = smul.addr %s710, 32
          %s712 = scalar_lea.hbm %s7, %s711
          %s714 = sshll.u32 %s691, 4
          %s715 = int_to_ptr.vmem [resolvable:$true] %s714
          %717 = dma.vmem_to_hbm [thread:$0]  %s715, 64, %s712, %s688
        $region56: #{tpu_custom_call.1} parent=47 // pred_fallthru
          _
        // Predicated region
        $region57: #{tpu_custom_call.1} parent=47 // pred_check
          %p718 = pneg %p244
        $region58: #{tpu_custom_call.1} parent=47 // pred_check_branch
          %720 = sbr.rel (%p718) target = $region60
        $region59: #{tpu_custom_call.1} parent=47 // pred_region
          %s721 = smul.u32 2, %s35
          %s723 = ssub.s32 64, 64
          %724 = vsyncadd %s693, %s723
          %s725 = smul.addr %s34, 2
          %s726 = sadd.s32 %s721, %s725
          %s727 = smul.addr %s726, 32
          %s728 = scalar_lea.hbm %s8, %s727
          %s730 = sshll.u32 %s696, 4
          %s731 = int_to_ptr.vmem [resolvable:$true] %s730
          %733 = dma.vmem_to_hbm [thread:$0]  %s731, 64, %s728, %s693
        $region60: #{tpu_custom_call.1} parent=47 // pred_fallthru
          _
        // Predicated region
        $region61: #{tpu_custom_call.1} parent=47 // pred_check
          %p734 = pneg %p272
        $region62: #{tpu_custom_call.1} parent=47 // pred_check_branch
          %736 = sbr.rel (%p734) target = $region64
        $region63: #{tpu_custom_call.1} parent=47 // pred_region
          %s737 = smul.u32 2, %s35
          %s739 = ssub.s32 512, 512
          %740 = vsyncadd %s698, %s739
          %s741 = smul.addr %s34, 4
          %s742 = sadd.s32 %s737, %s741
          %s743 = smul.addr %s742, 128
          %s744 = scalar_lea.hbm %s9, %s743
          %s745 = sshll.u32 %s701, 4
          %s746 = int_to_ptr.vmem [resolvable:$true] %s745
          %751 = dma.vmem_to_hbm [thread:$0]  %s746, 512, %s744, %s698, 256, 256, 16
        $region64: #{tpu_custom_call.1} parent=47 // pred_fallthru
          _
      $region48: #{tpu_custom_call.1} parent=5 // pred_fallthru
        _
      %p752 = scmp.le.s32.totalorder 2, %s25
      // Predicated region
      $region65: #{tpu_custom_call.1} parent=5 // pred_check
        %p753 = pneg %p752
      $region66: #{tpu_custom_call.1} parent=5 // pred_check_branch
        %755 = sbr.rel (%p753) target = $region68
      $region67: #{tpu_custom_call.1} parent=5 // pred_region
        %s756 = ssub.s32 %s25, 2
        // Predicated region
        $region69: #{tpu_custom_call.1} parent=67 // pred_check
          %p757 = pneg %p222
        $region70: #{tpu_custom_call.1} parent=67 // pred_check_branch
          %759 = sbr.rel (%p757) target = $region72
        $region71: #{tpu_custom_call.1} parent=67 // pred_region
          %s760 = sand.u32 %s207, 1
          %s761 = scalar_lea.sflag [#allocation4], %s760
          %s762 = sand.u32 %s207, 1
          %s763 = smul.addr %s762, 4
          %s764 = scalar_lea.vmem [#allocation5], %s763
          %765 = dma.done %s761, 64
        $region72: #{tpu_custom_call.1} parent=67 // pred_fallthru
          _
        // Predicated region
        $region73: #{tpu_custom_call.1} parent=67 // pred_check
          %p766 = pneg %p250
        $region74: #{tpu_custom_call.1} parent=67 // pred_check_branch
          %768 = sbr.rel (%p766) target = $region76
        $region75: #{tpu_custom_call.1} parent=67 // pred_region
          %s769 = sand.u32 %s31, 1
          %s770 = scalar_lea.sflag [#allocation7], %s769
          %s771 = sand.u32 %s235, 1
          %s772 = smul.addr %s771, 4
          %s773 = scalar_lea.vmem [#allocation6], %s772
          %774 = dma.done %s770, 64
        $region76: #{tpu_custom_call.1} parent=67 // pred_fallthru
          _
        // Predicated region
        $region77: #{tpu_custom_call.1} parent=67 // pred_check
          %p775 = pneg %p278
        $region78: #{tpu_custom_call.1} parent=67 // pred_check_branch
          %777 = sbr.rel (%p775) target = $region80
        $region79: #{tpu_custom_call.1} parent=67 // pred_region
          %s778 = sand.u32 %s31, 1
          %s779 = scalar_lea.sflag [#allocation7], %s778
          %s780 = sand.u32 %s263, 1
          %s781 = smul.addr %s780, 32
          %s782 = scalar_lea.vmem [#allocation8], %s781
          %783 = dma.done %s779, 512
        $region80: #{tpu_custom_call.1} parent=67 // pred_fallthru
          _
      $region68: #{tpu_custom_call.1} parent=5 // pred_fallthru
        _
    $region6: #{tpu_custom_call.1} parent=1 // loop_footer
      %s29 = sadd.s32 1, %s25
    $region7: #{tpu_custom_call.1} parent=1 // loop_footer_branch
      %24 = sbr.rel target = $region3
    $region8: #{tpu_custom_call.1} parent=1 // loop_exit
      _
    %784 = vsyncpa [#allocation3], 1
    %s785 = scalar_lea.sflag [#allocation3], 1
    %786 = vsyncpa %s785, 1
    %787 = vsyncpa [#allocation4], 1
    %s788 = scalar_lea.sflag [#allocation4], 1
    %789 = vsyncpa %s788, 1
    %790 = vsyncpa [#allocation7], 1
    %s791 = scalar_lea.sflag [#allocation7], 1
    %792 = vsyncpa %s791, 1

</llo_original>
